<compile_context>
chip_gen: v7x
topology: tpu7x:2x2x1
jax: 0.10.0
libtpu: 0.0.40
codegen_flags: <defaults>
</compile_context>

<pallas_src>
import jax
import jax.numpy as jnp
from jax.experimental import pallas as pl
from jax.experimental.pallas import tpu as pltpu


# -----------------------------------------------------------------------------
# Shared cell math (all operands already f32, all slabs lane-dense).
#   x        (B, H)   input zero-padded to hidden width
#   h, c     (B, H)
#   u_top    (H, R)   [u_x (padded to H rows) | 0]     -> x-side first stage
#   u_bot    (H, R)   [0 | u_h]                         -> h-side first stage
#   v_flat   (R, 4H)  [v_x.T ; v_h.T], gate-lane-major
#   coef_x   (1, 4H)  dia_x - sum_r(u_x*v_x) per lane, zero beyond input_size
#   coef_h   (1, 4H)  dia_h - sum_r(u_h*v_h) per lane
#   bias     (1, 4H)  b_x + b_h
# -----------------------------------------------------------------------------
def _cell_math(x, h, c, u_top, u_bot, v_flat, coef_x, coef_h, bias):
    H = h.shape[1]

    # Fused block-diagonal first-stage projection: t = [x @ u_x | h @ u_h].
    t = (jnp.dot(x, u_top, preferred_element_type=jnp.float32)
         + jnp.dot(h, u_bot, preferred_element_type=jnp.float32))        # (B, R)

    # Second stage: ONE lane-dense matmul producing all 4 gates at once.
    lowered = jnp.dot(t, v_flat, preferred_element_type=jnp.float32)     # (B, 4H)

    # Fused diagonal-minus-refinement correction + bias on the full slab.
    x4 = jnp.concatenate([x, x, x, x], axis=-1)                          # (B, 4H)
    h4 = jnp.concatenate([h, h, h, h], axis=-1)                          # (B, 4H)
    pre = lowered + x4 * coef_x + h4 * coef_h + bias                     # (B, 4H)

    # Fused activations: one sigmoid pass over the slab, tanh on newgate lanes.
    act = jax.nn.sigmoid(pre)
    inputgate = act[:, 0:H]
    forgetgate = act[:, H:2 * H]
    outputgate = act[:, 2 * H:3 * H]
    newgate = jnp.tanh(pre[:, 3 * H:4 * H])

    c_next = forgetgate * c + inputgate * newgate
    h_next = outputgate * jnp.tanh(c_next)
    return h_next, c_next


# -----------------------------------------------------------------------------
# Single-step kernel.  Output is one lane-contiguous (B, 2H) slab:
#   out[:, :H] = h_next, out[:, H:] = c_next
# -----------------------------------------------------------------------------
def _vmlmf_cell_kernel(x_ref, h_ref, c_ref, u_top_ref, u_bot_ref, v_ref,
                       cx_ref, ch_ref, b_ref, out_ref):
    h_next, c_next = _cell_math(
        x_ref[...], h_ref[...], c_ref[...],
        u_top_ref[...], u_bot_ref[...], v_ref[...],
        cx_ref[...], ch_ref[...], b_ref[...])
    out_ref[...] = jnp.concatenate([h_next, c_next], axis=-1).astype(out_ref.dtype)


# -----------------------------------------------------------------------------
# Sequence-fused kernel: one grid step == one timestep; h/c live in VMEM
# scratch across the whole recurrence; weights are grid-invariant blocks.
# -----------------------------------------------------------------------------
def _vmlmf_seq_kernel(x_ref, h0_ref, c0_ref, u_top_ref, u_bot_ref, v_ref,
                      cx_ref, ch_ref, b_ref, out_ref, h_s, c_s):
    @pl.when(pl.program_id(0) == 0)
    def _():
        h_s[...] = h0_ref[...].astype(jnp.float32)
        c_s[...] = c0_ref[...].astype(jnp.float32)

    h_next, c_next = _cell_math(
        x_ref[0], h_s[...], c_s[...],
        u_top_ref[...], u_bot_ref[...], v_ref[...],
        cx_ref[...], ch_ref[...], b_ref[...])

    h_s[...] = h_next
    c_s[...] = c_next
    out_ref[0] = jnp.concatenate([h_next, c_next], axis=-1).astype(out_ref.dtype)


# -----------------------------------------------------------------------------
# Parameter packing (parameter-only work, hoisted: done once per model).
# -----------------------------------------------------------------------------
def prepare_vmlmf_params(u_x, u_h, v_x, v_h, b_x, b_h, dia_x, dia_h):
    D, Rx = u_x.shape
    H, Rh = u_h.shape
    R = Rx + Rh
    f32 = jnp.float32

    # First-stage block-diagonal factor, split into its two (H, R) halves so
    # the kernel never needs a concatenated [x | h] input:
    #   x_pad @ u_top + h @ u_bot == [x @ u_x | h @ u_h]
    u_top = jnp.zeros((H, R), f32).at[:D, :Rx].set(u_x.astype(f32))
    u_bot = jnp.zeros((H, R), f32).at[:, Rx:].set(u_h.astype(f32))

    # Second-stage factor as a single (R, 4H) matrix (gate-lane-major), so all
    # four gates come out of ONE MXU matmul, lane-dense.
    v_flat = jnp.concatenate([v_x.astype(f32).T, v_h.astype(f32).T], axis=0)  # (R, 4H)

    # Fused diag-minus-refinement coefficients, flattened to (1, 4H) rows.
    # Lane j = g*H + i:
    #   coef_x[j] = dia_x[i] - sum_r u_x[i,r] * v_x[j,r]   (i <  input_size)
    #   coef_x[j] = 0                                      (i >= input_size)
    #   coef_h[j] = dia_h[i] - sum_r u_h[i,r] * v_h[j,r]
    v_x_gm = v_x.astype(f32).reshape(4, H, Rx)
    v_h_gm = v_h.astype(f32).reshape(4, H, Rh)
    w_x = jnp.einsum('dr,gdr->gd', u_x.astype(f32), v_x_gm[:, :D, :])   # (4, D)
    w_h = jnp.einsum('hr,ghr->gh', u_h.astype(f32), v_h_gm)             # (4, H)
    coef_x = jnp.zeros((4, H), f32).at[:, :D].set(
        dia_x.astype(f32).reshape(1, D) - w_x).reshape(1, 4 * H)
    coef_h = (dia_h.astype(f32).reshape(1, H) - w_h).reshape(1, 4 * H)

    bias = (b_x + b_h).astype(f32).reshape(1, 4 * H)
    return u_top, u_bot, v_flat, coef_x, coef_h, bias


# -----------------------------------------------------------------------------
# One cell step given packed parameters.
# -----------------------------------------------------------------------------
def vmlmf_cell_step(x, h, c, packed):
    u_top, u_bot, v_flat, coef_x, coef_h, bias = packed
    B, D = x.shape
    H = h.shape[1]
    R = u_top.shape[1]
    assert H >= D, "MyVMLMFCell forward requires hidden_size >= input_size"

    x_pad = jnp.pad(x.astype(jnp.float32), ((0, 0), (0, H - D)))        # (B, H)

    args = (x_pad, h.astype(jnp.float32), c.astype(jnp.float32),
            u_top, u_bot, v_flat, coef_x, coef_h, bias)
    flops = 2 * B * H * R * 2 + 2 * B * R * 4 * H + 12 * B * 4 * H
    transcend = B * (4 * H + 2 * H)
    bytes_acc = sum(a.size * a.dtype.itemsize for a in args) + B * 2 * H * 4

    vmem_spec = pl.BlockSpec(memory_space=pltpu.MemorySpace.VMEM)
    out = pl.pallas_call(
        _vmlmf_cell_kernel,
        in_specs=[vmem_spec] * 9,
        out_specs=vmem_spec,
        out_shape=jax.ShapeDtypeStruct((B, 2 * H), jnp.float32),
        cost_estimate=pl.CostEstimate(flops=flops, transcendentals=transcend,
                                      bytes_accessed=bytes_acc),
    )(*args)
    return out[:, :H], out[:, H:]


def vmlmf_cell(x, h, c, u_x, u_h, v_x, v_h, b_x, b_h, dia_x, dia_h):
    packed = prepare_vmlmf_params(u_x, u_h, v_x, v_h, b_x, b_h, dia_x, dia_h)
    return vmlmf_cell_step(x, h, c, packed)


# -----------------------------------------------------------------------------
# Whole-sequence recurrence in ONE pallas_call (weights VMEM-resident, h/c in
# scratch, per-step dispatch/DMA amortized over T).
# Returns (T, B, 2H) with [:, :, :H] = h_t and [:, :, H:] = c_t.
# -----------------------------------------------------------------------------
def vmlmf_cell_sequence(xs, h0, c0, packed):
    u_top, u_bot, v_flat, coef_x, coef_h, bias = packed
    T, B, D = xs.shape
    H = h0.shape[1]
    R = u_top.shape[1]
    assert H >= D, "MyVMLMFCell forward requires hidden_size >= input_size"

    xs_pad = jnp.pad(xs.astype(jnp.float32), ((0, 0), (0, 0), (0, H - D)))  # (T, B, H)

    inv = lambda t: (0, 0)   # grid-invariant (weights / initial state)
    out = pl.pallas_call(
        _vmlmf_seq_kernel,
        grid=(T,),
        in_specs=[
            pl.BlockSpec((1, B, H), lambda t: (t, 0, 0)),     # xs_pad (streamed)
            pl.BlockSpec((B, H), inv),                        # h0
            pl.BlockSpec((B, H), inv),                        # c0
            pl.BlockSpec((H, R), inv),                        # u_top
            pl.BlockSpec((H, R), inv),                        # u_bot
            pl.BlockSpec((R, 4 * H), inv),                    # v_flat
            pl.BlockSpec((1, 4 * H), inv),                    # coef_x
            pl.BlockSpec((1, 4 * H), inv),                    # coef_h
            pl.BlockSpec((1, 4 * H), inv),                    # bias
        ],
        out_specs=pl.BlockSpec((1, B, 2 * H), lambda t: (t, 0, 0)),
        out_shape=jax.ShapeDtypeStruct((T, B, 2 * H), jnp.float32),
        scratch_shapes=[pltpu.VMEM((B, H), jnp.float32),      # h carry
                        pltpu.VMEM((B, H), jnp.float32)],     # c carry
        compiler_params=pltpu.CompilerParams(
            dimension_semantics=("arbitrary",)),
    )(xs_pad, h0.astype(jnp.float32), c0.astype(jnp.float32),
      u_top, u_bot, v_flat, coef_x, coef_h, bias)
    return out


# -----------------------------------------------------------------------------
# Pure-JAX reference mirroring the PyTorch forward.
# -----------------------------------------------------------------------------
def vmlmf_cell_ref(x, h, c, u_x, u_h, v_x, v_h, b_x, b_h, dia_x, dia_h):
    B, D = x.shape
    H = h.shape[1]
    vm_x = jnp.concatenate([dia_x * x, jnp.zeros((B, H - D), x.dtype)], axis=1)
    vm_h = dia_h * h
    lowered_x = (x @ u_x) @ v_x.T
    lowered_h = (h @ u_h) @ v_h.T
    vm_refined_x = jnp.zeros((B, 4 * H), x.dtype)
    vm_refined_h = jnp.zeros((B, 4 * H), x.dtype)
    for g in range(0, 4 * H, H):
        vm_refined_x = vm_refined_x.at[:, g:g + D].set(
            x * jnp.sum(u_x * v_x[g:g + D, :], axis=1))
        vm_refined_h = vm_refined_h.at[:, g:g + H].set(
            h * jnp.sum(u_h * v_h[g:g + H, :], axis=1))
    gx = lowered_x - vm_refined_x + b_x
    gh = lowered_h - vm_refined_h + b_h
    xi, xf, xo, xn = jnp.split(gx, 4, axis=1)
    hi, hf, ho, hn = jnp.split(gh, 4, axis=1)
    inputgate = jax.nn.sigmoid(xi + hi + vm_x + vm_h)
    forgetgate = jax.nn.sigmoid(xf + hf + vm_x + vm_h)
    outputgate = jax.nn.sigmoid(xo + ho + vm_x + vm_h)
    newgate = jnp.tanh(xn + hn + vm_x + vm_h)
    c_next = forgetgate * c + inputgate * newgate
    h_next = outputgate * jnp.tanh(c_next)
    return h_next, c_next


def vmlmf_seq_ref(xs, h0, c0, u_x, u_h, v_x, v_h, b_x, b_h, dia_x, dia_h):
    def step(carry, x):
        h, c = carry
        h2, c2 = vmlmf_cell_ref(x, h, c, u_x, u_h, v_x, v_h, b_x, b_h,
                                dia_x, dia_h)
        return (h2, c2), jnp.concatenate([h2, c2], axis=-1)
    _, outs = jax.lax.scan(step, (h0, c0), xs)
    return outs


if __name__ == "__main__":
    # Small shapes consistent with the module's forward.
    # B = 8 fills the f32 sublane dimension; 4H = 128 fills the lane dim.
    B, D, H = 8, 16, 32          # batch, input_size, hidden_size
    Rx, Rh = 8, 8                # w_rank, u_ranks
    T = 6                        # demo sequence length for the fused version

    key = jax.random.PRNGKey(0)
    keys = jax.random.split(key, 12)
    f32 = jnp.float32

    x = jax.random.normal(keys[0], (B, D), dtype=f32)
    h = jax.random.normal(keys[1], (B, H), dtype=f32)
    c = jax.random.normal(keys[2], (B, H), dtype=f32)
    xs = jax.random.normal(keys[11], (T, B, D), dtype=f32)

    # Deterministic parameter init: 0.1 * N(0, 1), same shapes as the nn.Module.
    u_x = 0.1 * jax.random.normal(keys[3], (D, Rx), dtype=f32)
    u_h = 0.1 * jax.random.normal(keys[4], (H, Rh), dtype=f32)
    v_x = 0.1 * jax.random.normal(keys[5], (4 * H, Rx), dtype=f32)
    v_h = 0.1 * jax.random.normal(keys[6], (4 * H, Rh), dtype=f32)
    b_x = 0.1 * jax.random.normal(keys[7], (4 * H,), dtype=f32)
    b_h = 0.1 * jax.random.normal(keys[8], (4 * H,), dtype=f32)
    dia_x = 0.1 * jax.random.normal(keys[9], (1, D), dtype=f32)
    dia_h = 0.1 * jax.random.normal(keys[10], (1, H), dtype=f32)

    # --- single step -----------------------------------------------------
    h_next, c_next = jax.jit(vmlmf_cell)(
        x, h, c, u_x, u_h, v_x, v_h, b_x, b_h, dia_x, dia_h)
    jax.block_until_ready((h_next, c_next))

    h_ref, c_ref = vmlmf_cell_ref(
        x, h, c, u_x, u_h, v_x, v_h, b_x, b_h, dia_x, dia_h)
    assert h_next.shape == (B, H) and c_next.shape == (B, H)
    assert jnp.allclose(h_next, h_ref, atol=1e-4, rtol=1e-4)
    assert jnp.allclose(c_next, c_ref, atol=1e-4, rtol=1e-4)

    # --- sequence-fused recurrence (one pallas_call for T steps) ----------
    packed = prepare_vmlmf_params(u_x, u_h, v_x, v_h, b_x, b_h, dia_x, dia_h)
    seq_out = jax.jit(vmlmf_cell_sequence)(xs, h, c, packed)
    jax.block_until_ready(seq_out)

    seq_ref = vmlmf_seq_ref(xs, h, c, u_x, u_h, v_x, v_h, b_x, b_h,
                            dia_x, dia_h)
    assert seq_out.shape == (T, B, 2 * H)
    assert jnp.allclose(seq_out, seq_ref, atol=1e-4, rtol=1e-4)

    print("KERNEL_OK")
</pallas_src>

<mosaic_0001>
module attributes {stable_mosaic.version = 11 : i64} {
  func.func @_vmlmf_cell_kernel(%arg0: memref<8x32xf32, #tpu.memory_space<vmem>>, %arg1: memref<8x32xf32, #tpu.memory_space<vmem>>, %arg2: memref<8x32xf32, #tpu.memory_space<vmem>>, %arg3: memref<32x16xf32, #tpu.memory_space<vmem>>, %arg4: memref<32x16xf32, #tpu.memory_space<vmem>>, %arg5: memref<16x128xf32, #tpu.memory_space<vmem>>, %arg6: memref<1x128xf32, #tpu.memory_space<vmem>>, %arg7: memref<1x128xf32, #tpu.memory_space<vmem>>, %arg8: memref<1x128xf32, #tpu.memory_space<vmem>>, %arg9: memref<8x64xf32, #tpu.memory_space<vmem>>) attributes {dimension_semantics = [], scalar_prefetch = 0 : i64, scratch_operands = 0 : i64, tpu.core_type = #tpu.core_type<tc>} {
    %c0 = arith.constant 0 : index
    %c0_0 = arith.constant 0 : index
    %0 = vector.load %arg0[%c0, %c0_0] : memref<8x32xf32, #tpu.memory_space<vmem>>, vector<8x32xf32>
    %c0_1 = arith.constant 0 : index
    %c0_2 = arith.constant 0 : index
    %1 = vector.load %arg1[%c0_1, %c0_2] : memref<8x32xf32, #tpu.memory_space<vmem>>, vector<8x32xf32>
    %c0_3 = arith.constant 0 : index
    %c0_4 = arith.constant 0 : index
    %2 = vector.load %arg2[%c0_3, %c0_4] : memref<8x32xf32, #tpu.memory_space<vmem>>, vector<8x32xf32>
    %c0_5 = arith.constant 0 : index
    %c0_6 = arith.constant 0 : index
    %3 = vector.load %arg3[%c0_5, %c0_6] : memref<32x16xf32, #tpu.memory_space<vmem>>, vector<32x16xf32>
    %c0_7 = arith.constant 0 : index
    %c0_8 = arith.constant 0 : index
    %4 = vector.load %arg4[%c0_7, %c0_8] : memref<32x16xf32, #tpu.memory_space<vmem>>, vector<32x16xf32>
    %c0_9 = arith.constant 0 : index
    %c0_10 = arith.constant 0 : index
    %5 = vector.load %arg5[%c0_9, %c0_10] : memref<16x128xf32, #tpu.memory_space<vmem>>, vector<16x128xf32>
    %c0_11 = arith.constant 0 : index
    %c0_12 = arith.constant 0 : index
    %6 = vector.load %arg6[%c0_11, %c0_12] : memref<1x128xf32, #tpu.memory_space<vmem>>, vector<1x128xf32>
    %c0_13 = arith.constant 0 : index
    %c0_14 = arith.constant 0 : index
    %7 = vector.load %arg7[%c0_13, %c0_14] : memref<1x128xf32, #tpu.memory_space<vmem>>, vector<1x128xf32>
    %c0_15 = arith.constant 0 : index
    %c0_16 = arith.constant 0 : index
    %8 = vector.load %arg8[%c0_15, %c0_16] : memref<1x128xf32, #tpu.memory_space<vmem>>, vector<1x128xf32>
    %cst = arith.constant dense<0.000000e+00> : vector<8x16xf32>
    %9 = tpu.matmul %0, %3, %cst {dimension_numbers = #tpu.dot_dimension_numbers<[1], [0], [0], [1], [0, 0, 1, 1], [], []>} : vector<8x32xf32>, vector<32x16xf32>, vector<8x16xf32> -> vector<8x16xf32>
    %cst_17 = arith.constant dense<0.000000e+00> : vector<8x16xf32>
    %10 = tpu.matmul %1, %4, %cst_17 {dimension_numbers = #tpu.dot_dimension_numbers<[1], [0], [0], [1], [0, 0, 1, 1], [], []>} : vector<8x32xf32>, vector<32x16xf32>, vector<8x16xf32> -> vector<8x16xf32>
    %11 = arith.addf %9, %10 : vector<8x16xf32>
    %cst_18 = arith.constant dense<0.000000e+00> : vector<8x128xf32>
    %12 = tpu.matmul %11, %5, %cst_18 {dimension_numbers = #tpu.dot_dimension_numbers<[1], [0], [0], [1], [0, 0, 1, 1], [], []>} : vector<8x16xf32>, vector<16x128xf32>, vector<8x128xf32> -> vector<8x128xf32>
    %13 = tpu.concatenate %0, %0, %0, %0 in 1 : vector<8x32xf32>, vector<8x32xf32>, vector<8x32xf32>, vector<8x32xf32> -> vector<8x128xf32>
    %14 = tpu.concatenate %1, %1, %1, %1 in 1 : vector<8x32xf32>, vector<8x32xf32>, vector<8x32xf32>, vector<8x32xf32> -> vector<8x128xf32>
    %15 = vector.broadcast %6 : vector<1x128xf32> to vector<8x128xf32>
    %16 = arith.mulf %13, %15 : vector<8x128xf32>
    %17 = arith.addf %12, %16 : vector<8x128xf32>
    %18 = vector.broadcast %7 : vector<1x128xf32> to vector<8x128xf32>
    %19 = arith.mulf %14, %18 : vector<8x128xf32>
    %20 = arith.addf %17, %19 : vector<8x128xf32>
    %21 = vector.broadcast %8 : vector<1x128xf32> to vector<8x128xf32>
    %22 = arith.addf %20, %21 : vector<8x128xf32>
    %23 = arith.negf %22 : vector<8x128xf32>
    %24 = math.exp %23 : vector<8x128xf32>
    %cst_19 = arith.constant 1.000000e+00 : f32
    %25 = vector.broadcast %cst_19 : f32 to vector<8x128xf32>
    %26 = arith.addf %25, %24 : vector<8x128xf32>
    %27 = arith.divf %25, %26 : vector<8x128xf32>
    %28 = vector.extract_strided_slice %27 {offsets = [0, 0], sizes = [8, 32], strides = [1, 1]} : vector<8x128xf32> to vector<8x32xf32>
    %29 = vector.extract_strided_slice %27 {offsets = [0, 32], sizes = [8, 32], strides = [1, 1]} : vector<8x128xf32> to vector<8x32xf32>
    %30 = vector.extract_strided_slice %27 {offsets = [0, 64], sizes = [8, 32], strides = [1, 1]} : vector<8x128xf32> to vector<8x32xf32>
    %31 = vector.extract_strided_slice %22 {offsets = [0, 96], sizes = [8, 32], strides = [1, 1]} : vector<8x128xf32> to vector<8x32xf32>
    %32 = math.tanh %31 : vector<8x32xf32>
    %33 = arith.mulf %29, %2 : vector<8x32xf32>
    %34 = arith.mulf %28, %32 : vector<8x32xf32>
    %35 = arith.addf %33, %34 : vector<8x32xf32>
    %36 = math.tanh %35 : vector<8x32xf32>
    %37 = arith.mulf %30, %36 : vector<8x32xf32>
    %38 = tpu.concatenate %37, %35 in 1 : vector<8x32xf32>, vector<8x32xf32> -> vector<8x64xf32>
    %c0_20 = arith.constant 0 : index
    %c0_21 = arith.constant 0 : index
    %39 = vector.load %arg9[%c0_20, %c0_21] : memref<8x64xf32, #tpu.memory_space<vmem>>, vector<8x64xf32>
    tpu.vector_store %arg9[%c0_20, %c0_21], %38 {strides = array<i32>} : memref<8x64xf32, #tpu.memory_space<vmem>>, vector<8x64xf32>,
    return
  }
}

</mosaic_0001>

<llo_original>
// kernel: vmlmf_cell.1
$region0: #{vmlmf_cell.1}
  #allocation0 [shape = 'u32[]', space=smem, size = 0x4, offset = 0x4, fixed_abs, tag = 'smem constant byte address 0x4 - core index']
  #allocation1 [shape = 'u32[144,128]{1,0:T(1,128)}', space=vmem, size = 0x12000, scoped, tag = 'internal scratch']
  %s0 = inlined_call_operand.vmem [shape: f32[8,32], index: 0, kind: input, shape index: {}]
  %s1 = inlined_call_operand.vmem [shape: f32[8,32], index: 1, kind: input, shape index: {}]
  %s2 = inlined_call_operand.vmem [shape: f32[8,32], index: 2, kind: input, shape index: {}]
  %s3 = inlined_call_operand.vmem [shape: f32[32,16], index: 3, kind: input, shape index: {}]
  %s4 = inlined_call_operand.vmem [shape: f32[32,16], index: 4, kind: input, shape index: {}]
  %s5 = inlined_call_operand.vmem [shape: f32[16,128], index: 5, kind: input, shape index: {}]
  %s6 = inlined_call_operand.vmem [shape: f32[1,128], index: 6, kind: input, shape index: {}]
  %s7 = inlined_call_operand.vmem [shape: f32[1,128], index: 7, kind: input, shape index: {}]
  %s8 = inlined_call_operand.vmem [shape: f32[1,128], index: 8, kind: input, shape index: {}]
  %s9 = inlined_call_operand.vmem [shape: f32[8,64], index: 9, kind: output, shape index: {}]
  %s10 = sld [smem:[#allocation0]]
  $region46: #{vmlmf_cell.1} parent=0
    _
  %s12 = ssub.s32 1, %s10
  %s13 = scalar_select 0, %s12, %s10
  // Predicated region
  $region2: #{vmlmf_cell.1} parent=0 // pred_check
    _
  $region3: #{vmlmf_cell.1} parent=0 // pred_check_branch
    %15 = sbr.rel (0) target = $region5
  $region4: #{vmlmf_cell.1} parent=0 // pred_region
    _
  $region5: #{vmlmf_cell.1} parent=0 // pred_fallthru
    _
  // Predicated region
  $region6: #{vmlmf_cell.1} parent=0 // pred_check
    _
  $region7: #{vmlmf_cell.1} parent=0 // pred_check_branch
    %17 = sbr.rel (0) target = $region9
  $region8: #{vmlmf_cell.1} parent=0 // pred_region
    _
  $region9: #{vmlmf_cell.1} parent=0 // pred_fallthru
    _
  // Predicated region
  $region10: #{vmlmf_cell.1} parent=0 // pred_check
    _
  $region11: #{vmlmf_cell.1} parent=0 // pred_check_branch
    %19 = sbr.rel (0) target = $region13
  $region12: #{vmlmf_cell.1} parent=0 // pred_region
    _
  $region13: #{vmlmf_cell.1} parent=0 // pred_fallthru
    _
  // Predicated region
  $region14: #{vmlmf_cell.1} parent=0 // pred_check
    _
  $region15: #{vmlmf_cell.1} parent=0 // pred_check_branch
    %21 = sbr.rel (0) target = $region17
  $region16: #{vmlmf_cell.1} parent=0 // pred_region
    _
  $region17: #{vmlmf_cell.1} parent=0 // pred_fallthru
    _
  // Predicated region
  $region18: #{vmlmf_cell.1} parent=0 // pred_check
    _
  $region19: #{vmlmf_cell.1} parent=0 // pred_check_branch
    %23 = sbr.rel (0) target = $region21
  $region20: #{vmlmf_cell.1} parent=0 // pred_region
    _
  $region21: #{vmlmf_cell.1} parent=0 // pred_fallthru
    _
  // Predicated region
  $region22: #{vmlmf_cell.1} parent=0 // pred_check
    _
  $region23: #{vmlmf_cell.1} parent=0 // pred_check_branch
    %25 = sbr.rel (0) target = $region25
  $region24: #{vmlmf_cell.1} parent=0 // pred_region
    _
  $region25: #{vmlmf_cell.1} parent=0 // pred_fallthru
    _
  // Predicated region
  $region26: #{vmlmf_cell.1} parent=0 // pred_check
    _
  $region27: #{vmlmf_cell.1} parent=0 // pred_check_branch
    %27 = sbr.rel (0) target = $region29
  $region28: #{vmlmf_cell.1} parent=0 // pred_region
    _
  $region29: #{vmlmf_cell.1} parent=0 // pred_fallthru
    _
  // Predicated region
  $region30: #{vmlmf_cell.1} parent=0 // pred_check
    _
  $region31: #{vmlmf_cell.1} parent=0 // pred_check_branch
    %29 = sbr.rel (0) target = $region33
  $region32: #{vmlmf_cell.1} parent=0 // pred_region
    _
  $region33: #{vmlmf_cell.1} parent=0 // pred_fallthru
    _
  // Predicated region
  $region34: #{vmlmf_cell.1} parent=0 // pred_check
    _
  $region35: #{vmlmf_cell.1} parent=0 // pred_check_branch
    %31 = sbr.rel (0) target = $region37
  $region36: #{vmlmf_cell.1} parent=0 // pred_region
    _
  $region37: #{vmlmf_cell.1} parent=0 // pred_fallthru
    _
  %v32 = vld [vmem:[%s0] sm:$0xff]
  %v33 = vld [vmem:[%s1] sm:$0xff]
  %v34 = vld [vmem:[%s2] sm:$0xff]
  %v35 = vld [vmem:[%s3] sm:$0xff]
  %v36 = vld [vmem:[%s3 + $0x8] sm:$0xff]
  %v37 = vld [vmem:[%s3 + $0x10] sm:$0xff]
  %v38 = vld [vmem:[%s3 + $0x18] sm:$0xff]
  %v39 = vld [vmem:[%s4] sm:$0xff]
  %v40 = vld [vmem:[%s4 + $0x8] sm:$0xff]
  %v41 = vld [vmem:[%s4 + $0x10] sm:$0xff]
  %v42 = vld [vmem:[%s4 + $0x18] sm:$0xff]
  %v43 = vld [vmem:[%s5] sm:$0xff]
  %v44 = vld [vmem:[%s5 + $0x8] sm:$0xff]
  %v45 = vld [vmem:[%s6] sm:$0x1]
  %v46 = vld [vmem:[%s7] sm:$0x1]
  %v47 = vld [vmem:[%s8] sm:$0x1]
  %vm48 = vcmask 261120
  %v50 = vsel %vm48, %v33, 0
  %52 = vmatprep.subr.mxu0 0.0
  %53 = vmatpush1.msra.mxu0 %v39
  %54 = vmatprep.subr.mxu0 0.0
  %55 = vmatpush1.msra.mxu0 %v40
  %56 = vmatprep.subr.mxu0 0.0
  %57 = vmatpush1.msra.mxu0 %v41
  %58 = vmatprep.subr.mxu0 0.0
  %59 = vmatpush1.msra.mxu0 %v42
  %60 = vmatprep.subr.mxu0 0.0
  %61 = vmatpush1.msra.mxu0 0.0
  %62 = vmatprep.subr.mxu0 0.0
  %63 = vmatpush1.msra.mxu0 0.0
  %64 = vmatprep.subr.mxu0 0.0
  %65 = vmatpush1.msra.mxu0 0.0
  %66 = vmatprep.subr.mxu0 0.0
  %67 = vmatpush1.msra.mxu0 0.0
  %68 = vmatprep.subr.mxu0 0.0
  %69 = vmatpush1.msra.mxu0 0.0
  %70 = vmatprep.subr.mxu0 0.0
  %71 = vmatpush1.msra.mxu0 0.0
  %72 = vmatprep.subr.mxu0 0.0
  %73 = vmatpush1.msra.mxu0 0.0
  %74 = vmatprep.subr.mxu0 0.0
  %75 = vmatpush1.msra.mxu0 0.0
  %76 = vmatprep.subr.mxu0 0.0
  %77 = vmatpush1.msra.mxu0 0.0
  %78 = vmatprep.subr.mxu0 0.0
  %79 = vmatpush1.msra.mxu0 0.0
  %80 = vmatprep.subr.mxu0 0.0
  %81 = vmatpush1.msra.mxu0 0.0
  %82 = vmatprep.subr.mxu0 0.0
  %83 = vmatpush1.msra.mxu0 0.0
  %84 = vmatprep.subr.mxu0 0.0
  %85 = vmatpush1.msra.mxu0 0.0
  %86 = vmatprep.subr.mxu0 0.0
  %87 = vmatpush1.msra.mxu0 0.0
  %88 = vmatprep.subr.mxu0 0.0
  %89 = vmatpush1.msra.mxu0 0.0
  %90 = vmatprep.subr.mxu0 0.0
  %91 = vmatpush1.msra.mxu0 0.0
  %92 = vmatprep.subr.mxu0 0.0
  %93 = vmatpush1.msra.mxu0 0.0
  %94 = vmatprep.subr.mxu0 0.0
  %95 = vmatpush1.msra.mxu0 0.0
  %96 = vmatprep.subr.mxu0 0.0
  %97 = vmatpush1.msra.mxu0 0.0
  %98 = vmatprep.subr.mxu0 0.0
  %99 = vmatpush1.msra.mxu0 0.0
  %100 = vmatprep.subr.mxu0 0.0
  %101 = vmatpush1.msra.mxu0 0.0
  %102 = vmatprep.subr.mxu0 0.0
  %103 = vmatpush1.msra.mxu0 0.0
  %104 = vmatprep.subr.mxu0 0.0
  %105 = vmatpush1.msra.mxu0 0.0
  %106 = vmatprep.subr.mxu0 0.0
  %107 = vmatpush1.msra.mxu0 0.0
  %108 = vmatprep.subr.mxu0 0.0
  %109 = vmatpush1.msra.mxu0 0.0
  %110 = vmatprep.subr.mxu0 0.0
  %111 = vmatpush1.msra.mxu0 0.0
  %112 = vmatprep.subr.mxu0 0.0
  %113 = vmatpush1.msra.mxu0 0.0
  %114 = vmatprep.subr.mxu0 0.0
  %115 = vmatpush1.msra.mxu0 0.0
  %116 = vmatprep.mubr.f32.mxu0 0.0
  %117 = vmatmul.mubr.f32.gmra.mrb[0].mxu0 %v50
  %v118 = vpop.f32.mrb[0].mxu0
  %v119 = vadd.f32 0.0, %v118
  %v120 = vpop.f32.mrb[0].mxu0
  %121 = vdwg.mxu0
  %v123 = vsel %vm48, %v32, 0
  %125 = vmatprep.subr.mxu0 0.0
  %126 = vmatpush1.msra.mxu0 %v35
  %127 = vmatprep.subr.mxu0 0.0
  %128 = vmatpush1.msra.mxu0 %v36
  %129 = vmatprep.subr.mxu0 0.0
  %130 = vmatpush1.msra.mxu0 %v37
  %131 = vmatprep.subr.mxu0 0.0
  %132 = vmatpush1.msra.mxu0 %v38
  %133 = vmatprep.subr.mxu0 0.0
  %134 = vmatpush1.msra.mxu0 0.0
  %135 = vmatprep.subr.mxu0 0.0
  %136 = vmatpush1.msra.mxu0 0.0
  %137 = vmatprep.subr.mxu0 0.0
  %138 = vmatpush1.msra.mxu0 0.0
  %139 = vmatprep.subr.mxu0 0.0
  %140 = vmatpush1.msra.mxu0 0.0
  %141 = vmatprep.subr.mxu0 0.0
  %142 = vmatpush1.msra.mxu0 0.0
  %143 = vmatprep.subr.mxu0 0.0
  %144 = vmatpush1.msra.mxu0 0.0
  %145 = vmatprep.subr.mxu0 0.0
  %146 = vmatpush1.msra.mxu0 0.0
  %147 = vmatprep.subr.mxu0 0.0
  %148 = vmatpush1.msra.mxu0 0.0
  %149 = vmatprep.subr.mxu0 0.0
  %150 = vmatpush1.msra.mxu0 0.0
  %151 = vmatprep.subr.mxu0 0.0
  %152 = vmatpush1.msra.mxu0 0.0
  %153 = vmatprep.subr.mxu0 0.0
  %154 = vmatpush1.msra.mxu0 0.0
  %155 = vmatprep.subr.mxu0 0.0
  %156 = vmatpush1.msra.mxu0 0.0
  %157 = vmatprep.subr.mxu0 0.0
  %158 = vmatpush1.msra.mxu0 0.0
  %159 = vmatprep.subr.mxu0 0.0
  %160 = vmatpush1.msra.mxu0 0.0
  %161 = vmatprep.subr.mxu0 0.0
  %162 = vmatpush1.msra.mxu0 0.0
  %163 = vmatprep.subr.mxu0 0.0
  %164 = vmatpush1.msra.mxu0 0.0
  %165 = vmatprep.subr.mxu0 0.0
  %166 = vmatpush1.msra.mxu0 0.0
  %167 = vmatprep.subr.mxu0 0.0
  %168 = vmatpush1.msra.mxu0 0.0
  %169 = vmatprep.subr.mxu0 0.0
  %170 = vmatpush1.msra.mxu0 0.0
  %171 = vmatprep.subr.mxu0 0.0
  %172 = vmatpush1.msra.mxu0 0.0
  %173 = vmatprep.subr.mxu0 0.0
  %174 = vmatpush1.msra.mxu0 0.0
  %175 = vmatprep.subr.mxu0 0.0
  %176 = vmatpush1.msra.mxu0 0.0
  %177 = vmatprep.subr.mxu0 0.0
  %178 = vmatpush1.msra.mxu0 0.0
  %179 = vmatprep.subr.mxu0 0.0
  %180 = vmatpush1.msra.mxu0 0.0
  %181 = vmatprep.subr.mxu0 0.0
  %182 = vmatpush1.msra.mxu0 0.0
  %183 = vmatprep.subr.mxu0 0.0
  %184 = vmatpush1.msra.mxu0 0.0
  %185 = vmatprep.subr.mxu0 0.0
  %186 = vmatpush1.msra.mxu0 0.0
  %187 = vmatprep.subr.mxu0 0.0
  %188 = vmatpush1.msra.mxu0 0.0
  %189 = vmatprep.mubr.f32.mxu0 0.0
  %190 = vmatmul.mubr.f32.gmra.mrb[0].mxu0 %v123
  %v191 = vpop.f32.mrb[0].mxu0
  %v192 = vadd.f32 %v119, %v191
  %v193 = vpop.f32.mrb[0].mxu0
  %194 = vdwg.mxu0
  %195 = vrot.lane.b32.xlu0 %v32, 32
  %v196 = vpop.permute.xlu0 %195
  %198 = vrot.lane.b32.xlu0 %v32, 64
  %v199 = vpop.permute.xlu0 %198
  %201 = vrot.lane.b32.xlu0 %v32, 96
  %v202 = vpop.permute.xlu0 %201
  %v204 = vsel %vm48, %v32, %v196
  %vm205 = vcmask 523264
  %v206 = vsel %vm205, %v204, %v199
  %vm207 = vcmask 785408
  %v208 = vsel %vm207, %v206, %v202
  %209 = vrot.lane.b32.xlu0 %v33, 32
  %v210 = vpop.permute.xlu0 %209
  %212 = vrot.lane.b32.xlu0 %v33, 64
  %v213 = vpop.permute.xlu0 %212
  %215 = vrot.lane.b32.xlu0 %v33, 96
  %v216 = vpop.permute.xlu0 %215
  %v218 = vsel %vm48, %v33, %v210
  %v219 = vsel %vm205, %v218, %v213
  %v220 = vsel %vm207, %v219, %v216
  %v222 = vlaneseq
  %v223 = vshrl.u32 %v222, 7
  %v224 = vsub.s32 0, %v223
  %v225 = vrot.slane %v45, %v224
  %v227 = vmul.f32 %v208, %v225
  %vm228 = vcmask 130048
  %v230 = vsel %vm228, %v192, 0
  %232 = vmatprep.subr.mxu0 0.0
  %233 = vmatpush1.msra.mxu0 %v43
  %234 = vmatprep.subr.mxu0 0.0
  %235 = vmatpush1.msra.mxu0 %v44
  %236 = vmatprep.subr.mxu0 0.0
  %237 = vmatpush1.msra.mxu0 0.0
  %238 = vmatprep.subr.mxu0 0.0
  %239 = vmatpush1.msra.mxu0 0.0
  %240 = vmatprep.subr.mxu0 0.0
  %241 = vmatpush1.msra.mxu0 0.0
  %242 = vmatprep.subr.mxu0 0.0
  %243 = vmatpush1.msra.mxu0 0.0
  %244 = vmatprep.subr.mxu0 0.0
  %245 = vmatpush1.msra.mxu0 0.0
  %246 = vmatprep.subr.mxu0 0.0
  %247 = vmatpush1.msra.mxu0 0.0
  %248 = vmatprep.subr.mxu0 0.0
  %249 = vmatpush1.msra.mxu0 0.0
  %250 = vmatprep.subr.mxu0 0.0
  %251 = vmatpush1.msra.mxu0 0.0
  %252 = vmatprep.subr.mxu0 0.0
  %253 = vmatpush1.msra.mxu0 0.0
  %254 = vmatprep.subr.mxu0 0.0
  %255 = vmatpush1.msra.mxu0 0.0
  %256 = vmatprep.subr.mxu0 0.0
  %257 = vmatpush1.msra.mxu0 0.0
  %258 = vmatprep.subr.mxu0 0.0
  %259 = vmatpush1.msra.mxu0 0.0
  %260 = vmatprep.subr.mxu0 0.0
  %261 = vmatpush1.msra.mxu0 0.0
  %262 = vmatprep.subr.mxu0 0.0
  %263 = vmatpush1.msra.mxu0 0.0
  %264 = vmatprep.subr.mxu0 0.0
  %265 = vmatpush1.msra.mxu0 0.0
  %266 = vmatprep.subr.mxu0 0.0
  %267 = vmatpush1.msra.mxu0 0.0
  %268 = vmatprep.subr.mxu0 0.0
  %269 = vmatpush1.msra.mxu0 0.0
  %270 = vmatprep.subr.mxu0 0.0
  %271 = vmatpush1.msra.mxu0 0.0
  %272 = vmatprep.subr.mxu0 0.0
  %273 = vmatpush1.msra.mxu0 0.0
  %274 = vmatprep.subr.mxu0 0.0
  %275 = vmatpush1.msra.mxu0 0.0
  %276 = vmatprep.subr.mxu0 0.0
  %277 = vmatpush1.msra.mxu0 0.0
  %278 = vmatprep.subr.mxu0 0.0
  %279 = vmatpush1.msra.mxu0 0.0
  %280 = vmatprep.subr.mxu0 0.0
  %281 = vmatpush1.msra.mxu0 0.0
  %282 = vmatprep.subr.mxu0 0.0
  %283 = vmatpush1.msra.mxu0 0.0
  %284 = vmatprep.subr.mxu0 0.0
  %285 = vmatpush1.msra.mxu0 0.0
  %286 = vmatprep.subr.mxu0 0.0
  %287 = vmatpush1.msra.mxu0 0.0
  %288 = vmatprep.subr.mxu0 0.0
  %289 = vmatpush1.msra.mxu0 0.0
  %290 = vmatprep.subr.mxu0 0.0
  %291 = vmatpush1.msra.mxu0 0.0
  %292 = vmatprep.subr.mxu0 0.0
  %293 = vmatpush1.msra.mxu0 0.0
  %294 = vmatprep.subr.mxu0 0.0
  %295 = vmatpush1.msra.mxu0 0.0
  %296 = vmatprep.mubr.f32.mxu0 0.0
  %297 = vmatmul.mubr.f32.gmra.mrb[0].mxu0 %v230
  %v298 = vpop.f32.mrb[0].mxu0
  %v299 = vadd.f32 %v227, %v298
  %v300 = vpop.f32.mrb[0].mxu0
  %301 = vdwg.mxu0
  %v303 = vlaneseq
  %v304 = vshrl.u32 %v303, 7
  %v305 = vsub.s32 0, %v304
  %v306 = vrot.slane %v46, %v305
  %v308 = vmul.f32 %v220, %v306
  %v309 = vadd.f32 %v299, %v308
  %v311 = vlaneseq
  %v312 = vshrl.u32 %v311, 7
  %v313 = vsub.s32 0, %v312
  %v314 = vrot.slane %v47, %v313
  %v316 = vadd.f32 %v309, %v314
  %v317 = vxor.u32 %v316, 2147483648
  %v318 = vmul.f32 %v317, 1.442695
  %v319 = vpow.pop %v318
  %v320 = vadd.f32 %v319, 1.0
  %v321 = vrcp.pop %v320
  %v322 = vmul.f32 1.0, %v321
  %v323 = vtanh.pop %v316
  %325 = vrot.lane.b32.xlu0 %v34, 32
  %v326 = vpop.permute.xlu0 %325
  %v328 = vmul.f32 %v322, %v326
  %330 = vrot.lane.b32.xlu0 %v323, 32
  %v331 = vpop.permute.xlu0 %330
  %v333 = vmul.f32 %v322, %v331
  %335 = vrot.lane.b32.xlu0 %v333, 32
  %v336 = vpop.permute.xlu0 %335
  %v338 = vadd.f32 %v328, %v336
  %v339 = vtanh.pop %v338
  %341 = vrot.lane.b32.xlu0 %v339, 32
  %v342 = vpop.permute.xlu0 %341
  %v344 = vmul.f32 %v322, %v342
  %346 = vrot.lane.b32.xlu0 %v344, 64
  %v347 = vpop.permute.xlu0 %346
  %v349 = vsel %vm48, %v347, %v338
  %350 = vst.msk [vmem:[%s9] sm:$0xff] %vm205, %v349
  // Predicated region
  $region38: #{vmlmf_cell.1} parent=0 // pred_check
    _
  $region39: #{vmlmf_cell.1} parent=0 // pred_check_branch
    %352 = sbr.rel (0) target = $region41
  $region40: #{vmlmf_cell.1} parent=0 // pred_region
    _
  $region41: #{vmlmf_cell.1} parent=0 // pred_fallthru
    _
  // Predicated region
  $region42: #{vmlmf_cell.1} parent=0 // pred_check
    _
  $region43: #{vmlmf_cell.1} parent=0 // pred_check_branch
    %354 = sbr.rel (0) target = $region45
  $region44: #{vmlmf_cell.1} parent=0 // pred_region
    _
  $region45: #{vmlmf_cell.1} parent=0 // pred_fallthru
    _

</llo_original>
